<compile_context>
chip_gen: v7x
topology: tpu7x:2x2x1
jax: 0.10.0
libtpu: 0.0.40
codegen_flags: <defaults>
</compile_context>

<pallas_src>
import jax
import jax.numpy as jnp
import numpy as np
from jax import lax
from jax.experimental import pallas as pl
from jax.experimental.pallas import tpu as pltpu


def _round_up(x, m):
    return (x + m - 1) // m * m


def _vmem_capacity_bytes():
    try:
        return int(pltpu.get_tpu_info().vmem_capacity_bytes)
    except Exception:
        return 64 * 1024 * 1024  # conservative (v7x-sized) fallback


def _pick_pixel_tile(HW, vmem_cap):
    # Prefer the largest lane-dense tile (multiple of 128) that divides HW so that
    # HW_pad == HW and no post-kernel slice pass is needed; otherwise pad.
    p_cap = 2048 if vmem_cap >= (96 << 20) else 1024
    hi = min(p_cap, _round_up(HW, 128))
    for p in range(hi, 127, -128):
        if HW % p == 0:
            return p
    return hi


def _interp_deriv_kernel(rd_ref, ta_ref, img_ref, da_ref, px_acc):
    # rd_ref:  (1, 8, P)   rows: u, v, z/w, tid, du/dX, du/dY, dv/dX, dv/dY
    # ta_ref:  (1, 7A, Tt) rows: a0 | a1 | a2 | dup(a0-a2) | dup(a1-a2)   (transposed)
    # img_ref: (1, A, P)   lane-dense output block
    # da_ref:  (1, 2A, P)  interleaved (dX, dY) rows, lane-dense
    # px_acc:  (7A, P) f32 scratch accumulated over the triangle grid axis
    kt = pl.program_id(2)
    nkt = pl.num_programs(2)

    rd = rd_ref[0]                          # [8, P]
    ta = ta_ref[0]                          # [7A, Tt]
    Tt = ta.shape[1]
    P = rd.shape[1]
    A = img_ref.shape[1]

    tri_idx = rd[3:4, :].astype(jnp.int32) - 1                       # [1, P]; background -> -1
    iota_t = lax.broadcasted_iota(jnp.int32, (Tt, P), 0) + kt * Tt   # [Tt, P]
    oh = (iota_t == tri_idx).astype(jnp.float32)                     # [Tt, P] one-hot

    @pl.when(kt == 0)
    def _():
        px_acc[...] = jnp.zeros_like(px_acc)

    px_acc[...] += jnp.dot(ta, oh, preferred_element_type=jnp.float32)   # [7A, P]

    @pl.when(kt == nkt - 1)
    def _():
        px = px_acc[...]
        u = rd[0:1, :]
        v = rd[1:2, :]
        a0 = px[0:A]
        a1 = px[A:2 * A]
        a2 = px[2 * A:3 * A]
        img_ref[0] = u * a0 + v * a1 + (1.0 - u - v) * a2

        d02 = px[3 * A:5 * A]               # [2A, P] row-duplicated (a0 - a2)
        d12 = px[5 * A:7 * A]               # [2A, P] row-duplicated (a1 - a2)
        row = lax.broadcasted_iota(jnp.int32, (2 * A, P), 0)
        even = (row % 2) == 0               # even rows -> d/dX, odd rows -> d/dY
        mu = jnp.where(even, rd[4:5, :], rd[5:6, :])   # du/dX or du/dY
        mv = jnp.where(even, rd[6:7, :], rd[7:8, :])   # dv/dX or dv/dY
        da_ref[0] = d02 * mu + d12 * mv


def _interp_kernel(rast_ref, ta_ref, img_ref, px_acc):
    # rast_ref: (1, 4, P), ta_ref: (1, 3A, Tt), img_ref: (1, A, P), px_acc: (3A, P)
    kt = pl.program_id(2)
    nkt = pl.num_programs(2)

    r = rast_ref[0]                         # [4, P]
    ta = ta_ref[0]                          # [3A, Tt]
    Tt = ta.shape[1]
    P = r.shape[1]
    A = img_ref.shape[1]

    tri_idx = r[3:4, :].astype(jnp.int32) - 1
    iota_t = lax.broadcasted_iota(jnp.int32, (Tt, P), 0) + kt * Tt
    oh = (iota_t == tri_idx).astype(jnp.float32)

    @pl.when(kt == 0)
    def _():
        px_acc[...] = jnp.zeros_like(px_acc)

    px_acc[...] += jnp.dot(ta, oh, preferred_element_type=jnp.float32)

    @pl.when(kt == nkt - 1)
    def _():
        px = px_acc[...]
        u = r[0:1, :]
        v = r[1:2, :]
        img_ref[0] = u * px[0:A] + v * px[A:2 * A] + (1.0 - u - v) * px[2 * A:3 * A]


@jax.jit
def attribute_interpolation(attributes, rasterized, indices, derivatives=None):
    """Pallas equivalent of AttributeInterpolation.forward (diff_attrs='all')."""
    B, H, W, _ = rasterized.shape
    if attributes.ndim == 2:  # range-mode attrs: broadcast to instanced layout
        attributes = jnp.broadcast_to(attributes[None], (B,) + attributes.shape)
    attributes = attributes.astype(jnp.float32)
    _, V, A = attributes.shape
    T = indices.shape[0]
    HW = H * W
    assert T < (1 << 24), "triangle ids must be exactly representable in the f32 rast channel"

    vmem_cap = _vmem_capacity_bytes()
    vmem_limit = int(vmem_cap * 3 // 5)          # ~76 MiB on v5e/v6e, ~38 MiB on v7x

    # Pixel tiling (lane axis): prefer a tile that divides HW so HW_pad == HW.
    P = _pick_pixel_tile(HW, vmem_cap)
    HW_pad = _round_up(HW, P)
    n_ptiles = HW_pad // P
    # v7x has two TensorCores: keep the parallel (B, pixel) grid even when cheap to do so.
    if (B * n_ptiles) % 2 == 1 and P % 256 == 0:
        P //= 2
        HW_pad = _round_up(HW, P)
        n_ptiles = HW_pad // P

    # Triangle tiling (reduction axis): bound the [Tt, P] one-hot footprint.
    Tt = min(1024, max(128, (1 << 20) // P))
    Tt = min(Tt, _round_up(T, 128))
    T_pad = _round_up(T, Tt)
    n_ttiles = T_pad // Tt

    # Per-triangle corner attributes, gathered once in the wrapper (cheap XLA gather over T).
    tri = attributes[:, indices, :]          # [B, T, 3, A]
    a0, a1, a2 = tri[:, :, 0, :], tri[:, :, 1, :], tri[:, :, 2, :]

    compiler_params = pltpu.CompilerParams(
        dimension_semantics=("parallel", "parallel", "arbitrary"),
        vmem_limit_bytes=vmem_limit,
    )

    rast_nhwc = rasterized.astype(jnp.float32).reshape(B, HW, 4)

    if derivatives is not None:
        db_nhwc = derivatives.astype(jnp.float32).reshape(B, HW, 4)
        # One combined, transposed per-pixel slab: [B, 8, HW_pad] (single input DMA stream).
        rd = jnp.swapaxes(jnp.concatenate([rast_nhwc, db_nhwc], axis=-1), 1, 2)
        if HW_pad != HW:
            rd = jnp.pad(rd, ((0, 0), (0, 0), (0, HW_pad - HW)))  # padded pixels: tid=0 -> zeros

        C = 7 * A
        # Triangle table with the dX/dY interleave pre-folded in:
        # rows [a0 | a1 | a2 | dup(a0-a2) | dup(a1-a2)] after transposing to [B, C, T_pad].
        ta = jnp.concatenate(
            [a0, a1, a2,
             jnp.repeat(a0 - a2, 2, axis=-1),
             jnp.repeat(a1 - a2, 2, axis=-1)], axis=-1)           # [B, T, 7A]
        ta_T = jnp.swapaxes(ta, 1, 2)                              # [B, 7A, T]
        if T_pad != T:
            ta_T = jnp.pad(ta_T, ((0, 0), (0, 0), (0, T_pad - T)))

        cost = pl.CostEstimate(
            flops=2 * B * HW_pad * T_pad * C + 12 * B * HW_pad * C,
            transcendentals=0,
            bytes_accessed=4 * (rd.size + ta_T.size * n_ptiles + B * HW_pad * 3 * A),
        )

        img_t, da_t = pl.pallas_call(
            _interp_deriv_kernel,
            out_shape=(
                jax.ShapeDtypeStruct((B, A, HW_pad), jnp.float32),
                jax.ShapeDtypeStruct((B, 2 * A, HW_pad), jnp.float32),
            ),
            grid_spec=pltpu.PrefetchScalarGridSpec(
                num_scalar_prefetch=0,
                grid=(B, n_ptiles, n_ttiles),
                in_specs=[
                    pl.BlockSpec((1, 8, P), lambda b, i, k: (b, 0, i)),       # rast+db slab
                    pl.BlockSpec((1, C, Tt), lambda b, i, k: (b, 0, k)),      # tri table (T-tiled)
                ],
                out_specs=[
                    pl.BlockSpec((1, A, P), lambda b, i, k: (b, 0, i)),       # image (lane-dense)
                    pl.BlockSpec((1, 2 * A, P), lambda b, i, k: (b, 0, i)),   # interleaved dX/dY
                ],
                scratch_shapes=[pltpu.VMEM((C, P), jnp.float32)],
            ),
            compiler_params=compiler_params,
            cost_estimate=cost,
        )(rd, ta_T)

        image = jnp.swapaxes(img_t[:, :, :HW], 1, 2).reshape(B, H, W, A)
        derivs = jnp.swapaxes(da_t[:, :, :HW], 1, 2).reshape(B, H, W, 2 * A)
        return {"image": image, "derivatives": derivs}

    # derivatives=None: skip all derivative compute/DMAs.
    rast_T = jnp.swapaxes(rast_nhwc, 1, 2)                         # [B, 4, HW]
    if HW_pad != HW:
        rast_T = jnp.pad(rast_T, ((0, 0), (0, 0), (0, HW_pad - HW)))
    C = 3 * A
    ta_T = jnp.swapaxes(jnp.concatenate([a0, a1, a2], axis=-1), 1, 2)   # [B, 3A, T]
    if T_pad != T:
        ta_T = jnp.pad(ta_T, ((0, 0), (0, 0), (0, T_pad - T)))

    cost = pl.CostEstimate(
        flops=2 * B * HW_pad * T_pad * C + 6 * B * HW_pad * A,
        transcendentals=0,
        bytes_accessed=4 * (rast_T.size + ta_T.size * n_ptiles + B * HW_pad * A),
    )

    img_t = pl.pallas_call(
        _interp_kernel,
        out_shape=jax.ShapeDtypeStruct((B, A, HW_pad), jnp.float32),
        grid_spec=pltpu.PrefetchScalarGridSpec(
            num_scalar_prefetch=0,
            grid=(B, n_ptiles, n_ttiles),
            in_specs=[
                pl.BlockSpec((1, 4, P), lambda b, i, k: (b, 0, i)),
                pl.BlockSpec((1, C, Tt), lambda b, i, k: (b, 0, k)),
            ],
            out_specs=pl.BlockSpec((1, A, P), lambda b, i, k: (b, 0, i)),
            scratch_shapes=[pltpu.VMEM((C, P), jnp.float32)],
        ),
        compiler_params=compiler_params,
        cost_estimate=cost,
    )(rast_T, ta_T)
    image = jnp.swapaxes(img_t[:, :, :HW], 1, 2).reshape(B, H, W, A)
    # TODO(synk): nvdiffrast requires rast_db when diff_attrs='all'; we return an empty
    # [B,H,W,0] derivative tensor (like diff_attrs=None) instead of erroring.
    derivs = jnp.zeros((B, H, W, 0), jnp.float32)
    return {"image": image, "derivatives": derivs}


def _reference(attributes, rasterized, indices, derivatives):
    """Pure-JAX reference of nvdiffrast interpolate fwd (instanced mode)."""
    B, H, W, _ = rasterized.shape
    r = rasterized.astype(jnp.float32)
    u = r[..., 0:1]
    v = r[..., 1:2]
    tid = r[..., 3]
    valid = (tid > 0.0)[..., None].astype(jnp.float32)
    tri_idx = jnp.maximum(tid.astype(jnp.int32) - 1, 0)
    vidx = indices[tri_idx]  # [B,H,W,3]

    def gather(at, vi):  # at: [V,A], vi: [H,W]
        return at[vi]

    a0 = jax.vmap(gather)(attributes, vidx[..., 0])
    a1 = jax.vmap(gather)(attributes, vidx[..., 1])
    a2 = jax.vmap(gather)(attributes, vidx[..., 2])

    image = (u * a0 + v * a1 + (1.0 - u - v) * a2) * valid
    d = derivatives.astype(jnp.float32)
    dudx, dudy, dvdx, dvdy = d[..., 0:1], d[..., 1:2], d[..., 2:3], d[..., 3:4]
    dax = ((a0 - a2) * dudx + (a1 - a2) * dvdx) * valid
    day = ((a0 - a2) * dudy + (a1 - a2) * dvdy) * valid
    derivs = jnp.stack([dax, day], axis=-1).reshape(B, H, W, -1)
    return {"image": image, "derivatives": derivs}


if __name__ == "__main__":
    key = jax.random.PRNGKey(0)
    k_attr, k_tri, k_uv, k_zw, k_tid, k_db = jax.random.split(key, 6)

    B, H, W = 2, 16, 16
    V, T, A = 12, 8, 4

    attributes = jax.random.normal(k_attr, (B, V, A), jnp.float32)
    indices = jax.random.randint(k_tri, (T, 3), 0, V, jnp.int32)
    uv = jax.random.uniform(k_uv, (B, H, W, 2), jnp.float32)
    zw = jax.random.uniform(k_zw, (B, H, W, 1), jnp.float32)
    tid = jax.random.randint(k_tid, (B, H, W, 1), 0, T + 1).astype(jnp.float32)
    rasterized = jnp.concatenate([uv, zw, tid], axis=-1)  # [B,H,W,4]
    derivatives = 0.1 * jax.random.normal(k_db, (B, H, W, 4), jnp.float32)

    out = attribute_interpolation(attributes, rasterized, indices, derivatives)
    jax.block_until_ready(out)

    ref = _reference(attributes, rasterized, indices, derivatives)
    np.testing.assert_allclose(np.asarray(out["image"]),
                               np.asarray(ref["image"]), atol=1e-5, rtol=1e-5)
    np.testing.assert_allclose(np.asarray(out["derivatives"]),
                               np.asarray(ref["derivatives"]), atol=1e-5, rtol=1e-5)

    # Also exercise the no-derivative path.
    out_nd = attribute_interpolation(attributes, rasterized, indices, None)
    jax.block_until_ready(out_nd)
    np.testing.assert_allclose(np.asarray(out_nd["image"]),
                               np.asarray(ref["image"]), atol=1e-5, rtol=1e-5)
    assert out_nd["derivatives"].shape == (B, H, W, 0)

    print("KERNEL_OK")
</pallas_src>

<mosaic_0001>
module attributes {stable_mosaic.version = 11 : i64} {
  func.func @_interp_deriv_kernel(%arg0: i32, %arg1: i32, %arg2: i32, %arg3: memref<1x8x256xf32, #tpu.memory_space<vmem>>, %arg4: memref<1x28x128xf32, #tpu.memory_space<vmem>>, %arg5: memref<1x4x256xf32, #tpu.memory_space<vmem>>, %arg6: memref<1x8x256xf32, #tpu.memory_space<vmem>>, %arg7: memref<28x256xf32, #tpu.memory_space<vmem>>) attributes {dimension_semantics = [#tpu.dimension_semantics<parallel>, #tpu.dimension_semantics<parallel>, #tpu.dimension_semantics<arbitrary>], iteration_bounds = array<i64: 2, 1, 1>, scalar_prefetch = 0 : i64, scratch_operands = 1 : i64, tpu.core_type = #tpu.core_type<tc>, window_params = [{transform_indices = @transform_0, window_bounds = array<i64: 1, 8, 256>}, {transform_indices = @transform_1, window_bounds = array<i64: 1, 28, 128>}, {transform_indices = @transform_2, window_bounds = array<i64: 1, 4, 256>}, {transform_indices = @transform_3, window_bounds = array<i64: 1, 8, 256>}]} {
    %c0 = arith.constant 0 : index
    %c0_0 = arith.constant 0 : index
    %c0_1 = arith.constant 0 : index
    %0 = vector.load %arg3[%c0, %c0_0, %c0_1] : memref<1x8x256xf32, #tpu.memory_space<vmem>>, vector<1x8x256xf32>
    %1 = vector.shape_cast %0 : vector<1x8x256xf32> to vector<8x256xf32>
    %c0_2 = arith.constant 0 : index
    %c0_3 = arith.constant 0 : index
    %c0_4 = arith.constant 0 : index
    %2 = vector.load %arg4[%c0_2, %c0_3, %c0_4] : memref<1x28x128xf32, #tpu.memory_space<vmem>>, vector<1x28x128xf32>
    %3 = vector.shape_cast %2 : vector<1x28x128xf32> to vector<28x128xf32>
    %4 = vector.extract_strided_slice %1 {offsets = [3, 0], sizes = [1, 256], strides = [1, 1]} : vector<8x256xf32> to vector<1x256xf32>
    %5 = arith.fptosi %4 : vector<1x256xf32> to vector<1x256xi32>
    %c1_i32 = arith.constant 1 : i32
    %6 = vector.broadcast %c1_i32 : i32 to vector<1x256xi32>
    %7 = arith.subi %5, %6 : vector<1x256xi32>
    %8 = tpu.iota {dimensions = array<i32: 0>} : vector<128x256xi32>
    %c128_i32 = arith.constant 128 : i32
    %9 = arith.muli %arg2, %c128_i32 : i32
    %10 = vector.broadcast %9 : i32 to vector<128x256xi32>
    %11 = arith.addi %8, %10 : vector<128x256xi32>
    %12 = vector.broadcast %7 : vector<1x256xi32> to vector<128x256xi32>
    %13 = arith.cmpi eq, %11, %12 : vector<128x256xi32>
    %14 = arith.extui %13 : vector<128x256xi1> to vector<128x256xi32>
    %15 = arith.sitofp %14 : vector<128x256xi32> to vector<128x256xf32>
    %c0_i32 = arith.constant 0 : i32
    %16 = arith.cmpi eq, %arg2, %c0_i32 : i32
    %17 = arith.extui %16 : i1 to i32
    %c0_i32_5 = arith.constant 0 : i32
    %18 = arith.cmpi ne, %17, %c0_i32_5 : i32
    scf.if %18 {
      %cst_12 = arith.constant 0.000000e+00 : f32
      %26 = vector.broadcast %cst_12 : f32 to vector<28x256xf32>
      %c0_13 = arith.constant 0 : index
      %c0_14 = arith.constant 0 : index
      %27 = vector.load %arg7[%c0_13, %c0_14] : memref<28x256xf32, #tpu.memory_space<vmem>>, vector<28x256xf32>
      tpu.vector_store %arg7[%c0_13, %c0_14], %26 {strides = array<i32>} : memref<28x256xf32, #tpu.memory_space<vmem>>, vector<28x256xf32>,
    } else {
    }
    %c0_6 = arith.constant 0 : index
    %c0_7 = arith.constant 0 : index
    %19 = vector.load %arg7[%c0_6, %c0_7] : memref<28x256xf32, #tpu.memory_space<vmem>>, vector<28x256xf32>
    %cst = arith.constant dense<0.000000e+00> : vector<28x256xf32>
    %20 = tpu.matmul %3, %15, %cst {dimension_numbers = #tpu.dot_dimension_numbers<[1], [0], [0], [1], [0, 0, 1, 1], [], []>} : vector<28x128xf32>, vector<128x256xf32>, vector<28x256xf32> -> vector<28x256xf32>
    %21 = arith.addf %19, %20 : vector<28x256xf32>
    %c0_8 = arith.constant 0 : index
    %c0_9 = arith.constant 0 : index
    %22 = vector.load %arg7[%c0_8, %c0_9] : memref<28x256xf32, #tpu.memory_space<vmem>>, vector<28x256xf32>
    tpu.vector_store %arg7[%c0_8, %c0_9], %21 {strides = array<i32>} : memref<28x256xf32, #tpu.memory_space<vmem>>, vector<28x256xf32>,
    %c0_i32_10 = arith.constant 0 : i32
    %23 = arith.cmpi eq, %arg2, %c0_i32_10 : i32
    %24 = arith.extui %23 : i1 to i32
    %c0_i32_11 = arith.constant 0 : i32
    %25 = arith.cmpi ne, %24, %c0_i32_11 : i32
    scf.if %25 {
      %c0_12 = arith.constant 0 : index
      %c0_13 = arith.constant 0 : index
      %26 = vector.load %arg7[%c0_12, %c0_13] : memref<28x256xf32, #tpu.memory_space<vmem>>, vector<28x256xf32>
      %27 = vector.extract_strided_slice %1 {offsets = [0, 0], sizes = [1, 256], strides = [1, 1]} : vector<8x256xf32> to vector<1x256xf32>
      %28 = vector.extract_strided_slice %1 {offsets = [1, 0], sizes = [1, 256], strides = [1, 1]} : vector<8x256xf32> to vector<1x256xf32>
      %29 = vector.extract_strided_slice %26 {offsets = [0, 0], sizes = [4, 256], strides = [1, 1]} : vector<28x256xf32> to vector<4x256xf32>
      %30 = vector.extract_strided_slice %26 {offsets = [4, 0], sizes = [4, 256], strides = [1, 1]} : vector<28x256xf32> to vector<4x256xf32>
      %31 = vector.extract_strided_slice %26 {offsets = [8, 0], sizes = [4, 256], strides = [1, 1]} : vector<28x256xf32> to vector<4x256xf32>
      %32 = vector.broadcast %27 : vector<1x256xf32> to vector<4x256xf32>
      %33 = arith.mulf %32, %29 : vector<4x256xf32>
      %34 = vector.broadcast %28 : vector<1x256xf32> to vector<4x256xf32>
      %35 = arith.mulf %34, %30 : vector<4x256xf32>
      %36 = arith.addf %33, %35 : vector<4x256xf32>
      %cst_14 = arith.constant 1.000000e+00 : f32
      %37 = vector.broadcast %cst_14 : f32 to vector<1x256xf32>
      %38 = arith.subf %37, %27 : vector<1x256xf32>
      %39 = arith.subf %38, %28 : vector<1x256xf32>
      %40 = vector.broadcast %39 : vector<1x256xf32> to vector<4x256xf32>
      %41 = arith.mulf %40, %31 : vector<4x256xf32>
      %42 = arith.addf %36, %41 : vector<4x256xf32>
      %c0_15 = arith.constant 0 : index
      %c0_16 = arith.constant 0 : index
      %c0_17 = arith.constant 0 : index
      %43 = vector.load %arg5[%c0_15, %c0_16, %c0_17] : memref<1x4x256xf32, #tpu.memory_space<vmem>>, vector<1x4x256xf32>
      %44 = vector.shape_cast %43 : vector<1x4x256xf32> to vector<4x256xf32>
      %45 = vector.shape_cast %42 : vector<4x256xf32> to vector<1x4x256xf32>
      tpu.vector_store %arg5[%c0_15, %c0_16, %c0_17], %45 {strides = array<i32>} : memref<1x4x256xf32, #tpu.memory_space<vmem>>, vector<1x4x256xf32>,
      %46 = vector.extract_strided_slice %26 {offsets = [12, 0], sizes = [8, 256], strides = [1, 1]} : vector<28x256xf32> to vector<8x256xf32>
      %47 = vector.extract_strided_slice %26 {offsets = [20, 0], sizes = [8, 256], strides = [1, 1]} : vector<28x256xf32> to vector<8x256xf32>
      %48 = tpu.iota {dimensions = array<i32: 0>} : vector<8x256xi32>
      %c2_i32 = arith.constant 2 : i32
      %c0_i32_18 = arith.constant 0 : i32
      %49 = arith.cmpi eq, %c2_i32, %c0_i32_18 : i32
      %c1_i32_19 = arith.constant 1 : i32
      %50 = arith.select %49, %c1_i32_19, %c2_i32 : i32
      %51 = vector.broadcast %50 : i32 to vector<8x256xi32>
      %52 = arith.remsi %48, %51 : vector<8x256xi32>
      %c0_i32_20 = arith.constant 0 : i32
      %53 = vector.broadcast %c0_i32_20 : i32 to vector<8x256xi32>
      %54 = arith.cmpi ne, %52, %53 : vector<8x256xi32>
      %c0_i32_21 = arith.constant 0 : i32
      %55 = vector.broadcast %c0_i32_21 : i32 to vector<8x256xi32>
      %56 = arith.cmpi slt, %52, %55 : vector<8x256xi32>
      %c0_i32_22 = arith.constant 0 : i32
      %57 = arith.cmpi slt, %50, %c0_i32_22 : i32
      %58 = vector.broadcast %57 : i1 to vector<8x256xi1>
      %59 = vector.broadcast %58 : vector<8x256xi1> to vector<8x256xi1>
      %60 = arith.xori %56, %59 : vector<8x256xi1>
      %61 = arith.andi %60, %54 : vector<8x256xi1>
      %62 = vector.broadcast %50 : i32 to vector<8x256xi32>
      %63 = arith.addi %52, %62 : vector<8x256xi32>
      %64 = arith.select %61, %63, %52 : vector<8x256xi1>, vector<8x256xi32>
      %c0_i32_23 = arith.constant 0 : i32
      %65 = vector.broadcast %c0_i32_23 : i32 to vector<8x256xi32>
      %66 = arith.cmpi eq, %64, %65 : vector<8x256xi32>
      %67 = vector.extract_strided_slice %1 {offsets = [4, 0], sizes = [1, 256], strides = [1, 1]} : vector<8x256xf32> to vector<1x256xf32>
      %68 = vector.extract_strided_slice %1 {offsets = [5, 0], sizes = [1, 256], strides = [1, 1]} : vector<8x256xf32> to vector<1x256xf32>
      %69 = vector.shape_cast %67 : vector<1x256xf32> to vector<1x256xf32>
      %70 = vector.broadcast %69 : vector<1x256xf32> to vector<8x256xf32>
      %71 = vector.shape_cast %68 : vector<1x256xf32> to vector<1x256xf32>
      %72 = vector.broadcast %71 : vector<1x256xf32> to vector<8x256xf32>
      %73 = arith.select %66, %70, %72 : vector<8x256xi1>, vector<8x256xf32>
      %74 = vector.extract_strided_slice %1 {offsets = [6, 0], sizes = [1, 256], strides = [1, 1]} : vector<8x256xf32> to vector<1x256xf32>
      %75 = vector.extract_strided_slice %1 {offsets = [7, 0], sizes = [1, 256], strides = [1, 1]} : vector<8x256xf32> to vector<1x256xf32>
      %76 = vector.shape_cast %74 : vector<1x256xf32> to vector<1x256xf32>
      %77 = vector.broadcast %76 : vector<1x256xf32> to vector<8x256xf32>
      %78 = vector.shape_cast %75 : vector<1x256xf32> to vector<1x256xf32>
      %79 = vector.broadcast %78 : vector<1x256xf32> to vector<8x256xf32>
      %80 = arith.select %66, %77, %79 : vector<8x256xi1>, vector<8x256xf32>
      %81 = arith.mulf %46, %73 : vector<8x256xf32>
      %82 = arith.mulf %47, %80 : vector<8x256xf32>
      %83 = arith.addf %81, %82 : vector<8x256xf32>
      %c0_24 = arith.constant 0 : index
      %c0_25 = arith.constant 0 : index
      %c0_26 = arith.constant 0 : index
      %84 = vector.load %arg6[%c0_24, %c0_25, %c0_26] : memref<1x8x256xf32, #tpu.memory_space<vmem>>, vector<1x8x256xf32>
      %85 = vector.shape_cast %84 : vector<1x8x256xf32> to vector<8x256xf32>
      %86 = vector.shape_cast %83 : vector<8x256xf32> to vector<1x8x256xf32>
      tpu.vector_store %arg6[%c0_24, %c0_25, %c0_26], %86 {strides = array<i32>} : memref<1x8x256xf32, #tpu.memory_space<vmem>>, vector<1x8x256xf32>,
    } else {
    }
    return
  }
  func.func @transform_0(%arg0: i32, %arg1: i32, %arg2: i32) -> (i32, i32, i32) {
    %c0_i32 = arith.constant 0 : i32
    %c0_i32_0 = arith.constant 0 : i32
    return %arg0, %c0_i32, %arg1 : i32, i32, i32
  }
  func.func @transform_1(%arg0: i32, %arg1: i32, %arg2: i32) -> (i32, i32, i32) {
    %c0_i32 = arith.constant 0 : i32
    %c0_i32_0 = arith.constant 0 : i32
    return %arg0, %c0_i32, %arg2 : i32, i32, i32
  }
  func.func @transform_2(%arg0: i32, %arg1: i32, %arg2: i32) -> (i32, i32, i32) {
    %c0_i32 = arith.constant 0 : i32
    %c0_i32_0 = arith.constant 0 : i32
    return %arg0, %c0_i32, %arg1 : i32, i32, i32
  }
  func.func @transform_3(%arg0: i32, %arg1: i32, %arg2: i32) -> (i32, i32, i32) {
    %c0_i32 = arith.constant 0 : i32
    %c0_i32_0 = arith.constant 0 : i32
    return %arg0, %c0_i32, %arg1 : i32, i32, i32
  }
}

</mosaic_0001>

<llo_original>
// kernel: attribute_interpolation.1
$region0: #{attribute_interpolation.1}
  #allocation0 [shape = 'u32[]', space=smem, size = 0x4, offset = 0x4, fixed_abs, tag = 'smem constant byte address 0x4 - core index']
  #allocation1 [shape = 'u32[144,128]{1,0:T(1,128)}', space=vmem, size = 0x12000, scoped, tag = 'internal scratch']
  #allocation2 [shape = 'f32[28,256]{1,0:T(8,128)}', space=vmem, size = 0x8000, scoped, tag = 'scratch operand']
  %s0 = inlined_call_operand.vmem [shape: f32[2,8,256], index: 0, kind: input, shape index: {}]
  %s1 = inlined_call_operand.vmem [shape: f32[2,28,128], index: 1, kind: input, shape index: {}]
  %s2 = inlined_call_operand.vmem [shape: f32[2,4,256], index: 2, kind: output, shape index: {0}]
  %s3 = inlined_call_operand.vmem [shape: f32[2,8,256], index: 3, kind: output, shape index: {1}]
  %4 = xla_tuple %s2, %s3
  %s5 = sld [smem:[#allocation0]]
  $region57: #{attribute_interpolation.1} parent=0
    _
  %s7 = ssub.s32 1, %s5
  %s8 = scalar_select 0, %s7, %s5
  loop: start=0, step=1, limit=4
  $region2: #{attribute_interpolation.1} parent=0 // loop_pre_header
    _
  $region3: #{attribute_interpolation.1} parent=0 // loop_header
    %s10 = sphi 0, %s14
    %p11 = scmp.ge.s32.totalorder %s10, 4
    %s17 = sphi 0, %s36
    %s18 = sphi 0, %s32
    %s19 = sphi 0, %s28
    %s20 = sphi 0, %s17
    %s21 = sphi 0, %s18
    %s22 = sphi 0, %s19
    %s23 = sphi 0, %s20
    %s24 = sphi 0, %s21
    %s25 = sphi 0, %s22
    %s41 = sphi 0, %s43
    %s44 = sphi 0, %s41
    %s45 = sphi 0, %s44
    %s61 = sphi 0, %s45
    %s69 = sphi 0, %s71
    %s72 = sphi 0, %s69
    %s73 = sphi 0, %s72
    %s89 = sphi 0, %s73
    %s97 = sphi 0, %s99
    %s100 = sphi 0, %s97
    %s101 = sphi 0, %s100
    %s117 = sphi 0, %s101
    %s125 = sphi 0, %s127
    %s128 = sphi 0, %s125
    %s129 = sphi 0, %s128
    %s145 = sphi 0, %s129
  $region4: #{attribute_interpolation.1} parent=0 // loop_header_branch
    %13 = sbr.rel (%p11) target = $region8
  $region5: #{attribute_interpolation.1} parent=0 // loop_body
    %s15 = ssub.s32 %s10, 1
    %s16 = ssub.s32 %s10, 2
    %s26 = sadd.s32 1, %s19
    %p27 = scmp.ge.s32.totalorder %s26, 1
    %s28 = scalar_select %p27, 0, %s26
    %s29 = sadd.s32 1, %s18
    %s30 = scalar_select %p27, %s29, %s18
    %p31 = scmp.ge.s32.totalorder %s30, 1
    %s32 = scalar_select %p31, 0, %s30
    %s33 = sadd.s32 1, %s17
    %s34 = scalar_select %p31, %s33, %s17
    %p35 = scmp.ge.s32.totalorder %s34, 2
    %s36 = scalar_select %p35, 0, %s34
    %s37 = ssub.s32 %s17, %s36
    %s38 = ssub.s32 %s18, %s32
    %s39 = sor.u32 %s37, %s38
    %p40 = scmp.eq.s32.totalorder %s39, 0
    %s42 = sadd.s32 %s41, 1
    %s43 = scalar_select %p40, %s41, %s42
    %p46 = pneg %p40
    %p47 = scmp.eq.s32.totalorder %s10, 1
    %p48 = por %p46, %p47
    %p49 = scmp.ne.s32.totalorder %s41, %s44
    %p50 = scmp.eq.s32.totalorder %s10, 0
    %p51 = por %p49, %p50
    %p52 = scmp.ne.s32.totalorder %s41, %s44
    %p53 = scmp.eq.s32.totalorder %s15, 1
    %p54 = por %p52, %p53
    %p55 = scmp.ne.s32.totalorder %s44, %s45
    %p56 = scmp.eq.s32.totalorder %s15, 0
    %p57 = por %p55, %p56
    %p58 = scmp.ne.s32.totalorder %s44, %s45
    %p59 = scmp.eq.s32.totalorder %s16, 1
    %p60 = por %p58, %p59
    %p62 = scmp.ne.s32.totalorder %s45, %s61
    %p63 = scmp.eq.s32.totalorder %s16, 0
    %p64 = por %p62, %p63
    %s65 = ssub.s32 %s17, %s36
    %s66 = ssub.s32 %s19, %s28
    %s67 = sor.u32 %s65, %s66
    %p68 = scmp.eq.s32.totalorder %s67, 0
    %s70 = sadd.s32 %s69, 1
    %s71 = scalar_select %p68, %s69, %s70
    %p74 = pneg %p68
    %p75 = scmp.eq.s32.totalorder %s10, 1
    %p76 = por %p74, %p75
    %p77 = scmp.ne.s32.totalorder %s69, %s72
    %p78 = scmp.eq.s32.totalorder %s10, 0
    %p79 = por %p77, %p78
    %p80 = scmp.ne.s32.totalorder %s69, %s72
    %p81 = scmp.eq.s32.totalorder %s15, 1
    %p82 = por %p80, %p81
    %p83 = scmp.ne.s32.totalorder %s72, %s73
    %p84 = scmp.eq.s32.totalorder %s15, 0
    %p85 = por %p83, %p84
    %p86 = scmp.ne.s32.totalorder %s72, %s73
    %p87 = scmp.eq.s32.totalorder %s16, 1
    %p88 = por %p86, %p87
    %p90 = scmp.ne.s32.totalorder %s73, %s89
    %p91 = scmp.eq.s32.totalorder %s16, 0
    %p92 = por %p90, %p91
    %s93 = ssub.s32 %s17, %s36
    %s94 = ssub.s32 %s18, %s32
    %s95 = sor.u32 %s93, %s94
    %p96 = scmp.eq.s32.totalorder %s95, 0
    %s98 = sadd.s32 %s97, 1
    %s99 = scalar_select %p96, %s97, %s98
    %p102 = pneg %p96
    %p103 = scmp.eq.s32.totalorder %s10, 1
    %p104 = por %p102, %p103
    %p105 = scmp.ne.s32.totalorder %s97, %s100
    %p106 = scmp.eq.s32.totalorder %s10, 0
    %p107 = por %p105, %p106
    %p108 = scmp.ne.s32.totalorder %s97, %s100
    %p109 = scmp.eq.s32.totalorder %s15, 1
    %p110 = por %p108, %p109
    %p111 = scmp.ne.s32.totalorder %s100, %s101
    %p112 = scmp.eq.s32.totalorder %s15, 0
    %p113 = por %p111, %p112
    %p114 = scmp.ne.s32.totalorder %s100, %s101
    %p115 = scmp.eq.s32.totalorder %s16, 1
    %p116 = por %p114, %p115
    %p118 = scmp.ne.s32.totalorder %s101, %s117
    %p119 = scmp.eq.s32.totalorder %s16, 0
    %p120 = por %p118, %p119
    %s121 = ssub.s32 %s17, %s36
    %s122 = ssub.s32 %s18, %s32
    %s123 = sor.u32 %s121, %s122
    %p124 = scmp.eq.s32.totalorder %s123, 0
    %s126 = sadd.s32 %s125, 1
    %s127 = scalar_select %p124, %s125, %s126
    %p130 = pneg %p124
    %p131 = scmp.eq.s32.totalorder %s10, 1
    %p132 = por %p130, %p131
    %p133 = scmp.ne.s32.totalorder %s125, %s128
    %p134 = scmp.eq.s32.totalorder %s10, 0
    %p135 = por %p133, %p134
    %p136 = scmp.ne.s32.totalorder %s125, %s128
    %p137 = scmp.eq.s32.totalorder %s15, 1
    %p138 = por %p136, %p137
    %p139 = scmp.ne.s32.totalorder %s128, %s129
    %p140 = scmp.eq.s32.totalorder %s15, 0
    %p141 = por %p139, %p140
    %p142 = scmp.ne.s32.totalorder %s128, %s129
    %p143 = scmp.eq.s32.totalorder %s16, 1
    %p144 = por %p142, %p143
    %p146 = scmp.ne.s32.totalorder %s129, %s145
    %p147 = scmp.eq.s32.totalorder %s16, 0
    %p148 = por %p146, %p147
    %p149 = scmp.le.s32.totalorder 1, %s10
    %p150 = scmp.lt.s32.totalorder %s10, 3
    %p151 = pnand %p149, %p150
    %p152 = pneg %p151
    // Predicated region
    $region9: #{attribute_interpolation.1} parent=5 // pred_check
      _
    $region10: #{attribute_interpolation.1} parent=5 // pred_check_branch
      %154 = sbr.rel (%p151) target = $region12
    $region11: #{attribute_interpolation.1} parent=5 // pred_region
      %s155 = ssub.s32 %s10, 1
    $region12: #{attribute_interpolation.1} parent=5 // pred_fallthru
      _
    %p156 = scmp.lt.s32.totalorder %s10, 2
    // Predicated region
    $region13: #{attribute_interpolation.1} parent=5 // pred_check
      %p157 = pneg %p156
    $region14: #{attribute_interpolation.1} parent=5 // pred_check_branch
      %159 = sbr.rel (%p157) target = $region16
    $region15: #{attribute_interpolation.1} parent=5 // pred_region
      // Predicated region
      $region17: #{attribute_interpolation.1} parent=15 // pred_check
        %p160 = pneg %p51
      $region18: #{attribute_interpolation.1} parent=15 // pred_check_branch
        %162 = sbr.rel (%p160) target = $region20
      $region19: #{attribute_interpolation.1} parent=15 // pred_region
        %s163 = smul.u32 2, %s18
        %p164 = scmp.lt.s32.totalorder %s17, 1
        %s165 = scalar_select %p164, %s17, 1
        %p166 = scmp.lt.s32.totalorder %s163, 1
        %s167 = scalar_select %p166, %s163, 1
        %s168 = smul.addr %s165, 2
        %s169 = sadd.s32 %s167, %s168
        %s170 = smul.addr %s169, 8
        %s171 = scalar_lea.vmem %s0, %s170
        %s172 = smul.u32 2, %s18
      $region20: #{attribute_interpolation.1} parent=15 // pred_fallthru
        _
      // Predicated region
      $region21: #{attribute_interpolation.1} parent=15 // pred_check
        %p173 = pneg %p79
      $region22: #{attribute_interpolation.1} parent=15 // pred_check_branch
        %175 = sbr.rel (%p173) target = $region24
      $region23: #{attribute_interpolation.1} parent=15 // pred_region
        %p176 = scmp.lt.s32.totalorder %s17, 1
        %s177 = scalar_select %p176, %s17, 1
        %p178 = scmp.lt.s32.totalorder %s19, 0
        %s179 = scalar_select %p178, %s19, 0
        %s180 = smul.addr %s177, 4
        %s181 = sadd.s32 %s179, %s180
        %s182 = smul.addr %s181, 8
        %s183 = scalar_lea.vmem %s1, %s182
      $region24: #{attribute_interpolation.1} parent=15 // pred_fallthru
        _
    $region16: #{attribute_interpolation.1} parent=5 // pred_fallthru
      _
    %p184 = scmp.le.s32.totalorder 1, %s10
    %p185 = scmp.lt.s32.totalorder %s10, 3
    %p186 = pnand %p184, %p185
    %p187 = pneg %p186
    // Predicated region
    $region25: #{attribute_interpolation.1} parent=5 // pred_check
      _
    $region26: #{attribute_interpolation.1} parent=5 // pred_check_branch
      %189 = sbr.rel (%p186) target = $region28
    $region27: #{attribute_interpolation.1} parent=5 // pred_region
      %s190 = ssub.s32 %s10, 1
      %s191 = smul.u32 2, %s21
      %p192 = scmp.lt.s32.totalorder %s20, 1
      %s193 = scalar_select %p192, %s20, 1
      %p194 = scmp.lt.s32.totalorder %s191, 1
      %s195 = scalar_select %p194, %s191, 1
      %s196 = smul.addr %s193, 2
      %s197 = sadd.s32 %s195, %s196
      %s198 = smul.addr %s197, 8
      %s199 = scalar_lea.vmem %s0, %s198
      %p200 = pneg %p57
      %p201 = pneg %p54
      %p202 = scmp.lt.s32.totalorder %s20, 1
      %s203 = scalar_select %p202, %s20, 1
      %p204 = scmp.lt.s32.totalorder %s22, 0
      %s205 = scalar_select %p204, %s22, 0
      %s206 = smul.addr %s203, 4
      %s207 = sadd.s32 %s205, %s206
      %s208 = smul.addr %s207, 8
      %s209 = scalar_lea.vmem %s1, %s208
      %p210 = pneg %p85
      %p211 = pneg %p82
      %p212 = pneg %p113
      %p213 = pneg %p110
      %s214 = smul.u32 2, %s21
      %p215 = scmp.lt.s32.totalorder %s20, 1
      %s216 = scalar_select %p215, %s20, 1
      %p217 = scmp.lt.s32.totalorder %s214, 1
      %s218 = scalar_select %p217, %s214, 1
      %s219 = smul.addr %s216, 2
      %s220 = sadd.s32 %s218, %s219
      %s221 = smul.addr %s220, 4
      %s222 = scalar_lea.vmem %s2, %s221
      %p223 = pneg %p141
      %p224 = pneg %p138
      %s225 = smul.u32 2, %s21
      %p226 = scmp.lt.s32.totalorder %s20, 1
      %s227 = scalar_select %p226, %s20, 1
      %p228 = scmp.lt.s32.totalorder %s225, 1
      %s229 = scalar_select %p228, %s225, 1
      %s230 = smul.addr %s227, 2
      %s231 = sadd.s32 %s229, %s230
      %s232 = smul.addr %s231, 8
      %s233 = scalar_lea.vmem %s3, %s232
      %s234 = smul.u32 2, %s21
      %p235 = scmp.lt.s32.totalorder %s20, 1
      %s236 = scalar_select %p235, %s20, 1
      %p237 = scmp.lt.s32.totalorder %s234, 1
      %s238 = scalar_select %p237, %s234, 1
      %s239 = smul.addr %s236, 2
      %s240 = sadd.s32 %s238, %s239
      %s241 = smul.addr %s240, 8
      %s242 = scalar_lea.vmem %s0, %s241
      %s243 = smul.u32 2, %s21
      %p244 = scmp.lt.s32.totalorder %s20, 1
      %s245 = scalar_select %p244, %s20, 1
      %p246 = scmp.lt.s32.totalorder %s22, 0
      %s247 = scalar_select %p246, %s22, 0
      %s248 = smul.addr %s245, 4
      %s249 = sadd.s32 %s247, %s248
      %s250 = smul.addr %s249, 8
      %s251 = scalar_lea.vmem %s1, %s250
      %s252 = smul.u32 2, %s21
      %p253 = scmp.lt.s32.totalorder %s20, 1
      %s254 = scalar_select %p253, %s20, 1
      %p255 = scmp.lt.s32.totalorder %s252, 1
      %s256 = scalar_select %p255, %s252, 1
      %s257 = smul.addr %s254, 2
      %s258 = sadd.s32 %s256, %s257
      %s259 = smul.addr %s258, 4
      %s260 = scalar_lea.vmem %s2, %s259
      %s261 = smul.u32 2, %s21
      %s262 = smul.u32 2, %s21
      %p263 = scmp.lt.s32.totalorder %s20, 1
      %s264 = scalar_select %p263, %s20, 1
      %p265 = scmp.lt.s32.totalorder %s262, 1
      %s266 = scalar_select %p265, %s262, 1
      %s267 = smul.addr %s264, 2
      %s268 = sadd.s32 %s266, %s267
      %s269 = smul.addr %s268, 8
      %s270 = scalar_lea.vmem %s3, %s269
      %s271 = smul.u32 2, %s21
      %v272 = vld [vmem:[%s242] sm:$0xff]
      %v273 = vld [vmem:[%s242 + $0x8] sm:$0xff]
      %v274 = vld [vmem:[%s251] sm:$0xff]
      %v275 = vld [vmem:[%s251 + $0x8] sm:$0xff]
      %v276 = vld [vmem:[%s251 + $0x10] sm:$0xff]
      %v277 = vld [vmem:[%s251 + $0x18] sm:$0xf]
      %v278 = vcvt.f32.s32.to.zero.pseudo %v272
      %v279 = vcvt.f32.s32.to.zero.pseudo %v273
      %v280 = vsub.s32 %v278, 1
      %v281 = vsub.s32 %v279, 1
      %v282 = vlaneseq
      %v283 = vshrl.u32 %v282, 7
      %v284 = vadd.s32 %v283, 8
      %v285 = vadd.s32 %v283, 16
      %v286 = vadd.s32 %v283, 24
      %v287 = vadd.s32 %v283, 32
      %v288 = vadd.s32 %v283, 40
      %v289 = vadd.s32 %v283, 48
      %v290 = vadd.s32 %v283, 56
      %v291 = vadd.s32 %v283, 64
      %v292 = vadd.s32 %v283, 72
      %v293 = vadd.s32 %v283, 80
      %v294 = vadd.s32 %v283, 88
      %v295 = vadd.s32 %v283, 96
      %v296 = vadd.s32 %v283, 104
      %v297 = vadd.s32 %v283, 112
      %v298 = vadd.s32 %v283, 120
      %s299 = smul.u32 %s22, 128
      %v300 = vstv %s299
      %v301 = vadd.s32 %v283, %v300
      %v302 = vadd.s32 %v284, %v300
      %v303 = vadd.s32 %v285, %v300
      %v304 = vadd.s32 %v286, %v300
      %v305 = vadd.s32 %v287, %v300
      %v306 = vadd.s32 %v288, %v300
      %v307 = vadd.s32 %v289, %v300
      %v308 = vadd.s32 %v290, %v300
      %v309 = vadd.s32 %v291, %v300
      %v310 = vadd.s32 %v292, %v300
      %v311 = vadd.s32 %v293, %v300
      %v312 = vadd.s32 %v294, %v300
      %v313 = vadd.s32 %v295, %v300
      %v314 = vadd.s32 %v296, %v300
      %v315 = vadd.s32 %v297, %v300
      %v316 = vadd.s32 %v298, %v300
      %v317 = vlaneseq
      %v318 = vshrl.u32 %v317, 7
      %v319 = vsub.s32 3, %v318
      %v320 = vrot.slane %v280, %v319
      %v321 = vlaneseq
      %v322 = vshrl.u32 %v321, 7
      %v323 = vsub.s32 3, %v322
      %v324 = vrot.slane %v281, %v323
      %vm325 = vcmp.eq.s32.totalorder %v301, %v320
      %vm326 = vcmp.eq.s32.totalorder %v301, %v324
      %vm327 = vcmp.eq.s32.totalorder %v302, %v320
      %vm328 = vcmp.eq.s32.totalorder %v302, %v324
      %vm329 = vcmp.eq.s32.totalorder %v303, %v320
      %vm330 = vcmp.eq.s32.totalorder %v303, %v324
      %vm331 = vcmp.eq.s32.totalorder %v304, %v320
      %vm332 = vcmp.eq.s32.totalorder %v304, %v324
      %vm333 = vcmp.eq.s32.totalorder %v305, %v320
      %vm334 = vcmp.eq.s32.totalorder %v305, %v324
      %vm335 = vcmp.eq.s32.totalorder %v306, %v320
      %vm336 = vcmp.eq.s32.totalorder %v306, %v324
      %vm337 = vcmp.eq.s32.totalorder %v307, %v320
      %vm338 = vcmp.eq.s32.totalorder %v307, %v324
      %vm339 = vcmp.eq.s32.totalorder %v308, %v320
      %vm340 = vcmp.eq.s32.totalorder %v308, %v324
      %vm341 = vcmp.eq.s32.totalorder %v309, %v320
      %vm342 = vcmp.eq.s32.totalorder %v309, %v324
      %vm343 = vcmp.eq.s32.totalorder %v310, %v320
      %vm344 = vcmp.eq.s32.totalorder %v310, %v324
      %vm345 = vcmp.eq.s32.totalorder %v311, %v320
      %vm346 = vcmp.eq.s32.totalorder %v311, %v324
      %vm347 = vcmp.eq.s32.totalorder %v312, %v320
      %vm348 = vcmp.eq.s32.totalorder %v312, %v324
      %vm349 = vcmp.eq.s32.totalorder %v313, %v320
      %vm350 = vcmp.eq.s32.totalorder %v313, %v324
      %vm351 = vcmp.eq.s32.totalorder %v314, %v320
      %vm352 = vcmp.eq.s32.totalorder %v314, %v324
      %vm353 = vcmp.eq.s32.totalorder %v315, %v320
      %vm354 = vcmp.eq.s32.totalorder %v315, %v324
      %vm355 = vcmp.eq.s32.totalorder %v316, %v320
      %vm356 = vcmp.eq.s32.totalorder %v316, %v324
      %v357 = vsel %vm325, 1, 0
      %v358 = vsel %vm326, 1, 0
      %v359 = vsel %vm327, 1, 0
      %v360 = vsel %vm328, 1, 0
      %v361 = vsel %vm329, 1, 0
      %v362 = vsel %vm330, 1, 0
      %v363 = vsel %vm331, 1, 0
      %v364 = vsel %vm332, 1, 0
      %v365 = vsel %vm333, 1, 0
      %v366 = vsel %vm334, 1, 0
      %v367 = vsel %vm335, 1, 0
      %v368 = vsel %vm336, 1, 0
      %v369 = vsel %vm337, 1, 0
      %v370 = vsel %vm338, 1, 0
      %v371 = vsel %vm339, 1, 0
      %v372 = vsel %vm340, 1, 0
      %v373 = vsel %vm341, 1, 0
      %v374 = vsel %vm342, 1, 0
      %v375 = vsel %vm343, 1, 0
      %v376 = vsel %vm344, 1, 0
      %v377 = vsel %vm345, 1, 0
      %v378 = vsel %vm346, 1, 0
      %v379 = vsel %vm347, 1, 0
      %v380 = vsel %vm348, 1, 0
      %v381 = vsel %vm349, 1, 0
      %v382 = vsel %vm350, 1, 0
      %v383 = vsel %vm351, 1, 0
      %v384 = vsel %vm352, 1, 0
      %v385 = vsel %vm353, 1, 0
      %v386 = vsel %vm354, 1, 0
      %v387 = vsel %vm355, 1, 0
      %v388 = vsel %vm356, 1, 0
      %v389 = vcvt.s32.f32 %v357
      %v390 = vcvt.s32.f32 %v358
      %v391 = vcvt.s32.f32 %v359
      %v392 = vcvt.s32.f32 %v360
      %v393 = vcvt.s32.f32 %v361
      %v394 = vcvt.s32.f32 %v362
      %v395 = vcvt.s32.f32 %v363
      %v396 = vcvt.s32.f32 %v364
      %v397 = vcvt.s32.f32 %v365
      %v398 = vcvt.s32.f32 %v366
      %v399 = vcvt.s32.f32 %v367
      %v400 = vcvt.s32.f32 %v368
      %v401 = vcvt.s32.f32 %v369
      %v402 = vcvt.s32.f32 %v370
      %v403 = vcvt.s32.f32 %v371
      %v404 = vcvt.s32.f32 %v372
      %v405 = vcvt.s32.f32 %v373
      %v406 = vcvt.s32.f32 %v374
      %v407 = vcvt.s32.f32 %v375
      %v408 = vcvt.s32.f32 %v376
      %v409 = vcvt.s32.f32 %v377
      %v410 = vcvt.s32.f32 %v378
      %v411 = vcvt.s32.f32 %v379
      %v412 = vcvt.s32.f32 %v380
      %v413 = vcvt.s32.f32 %v381
      %v414 = vcvt.s32.f32 %v382
      %v415 = vcvt.s32.f32 %v383
      %v416 = vcvt.s32.f32 %v384
      %v417 = vcvt.s32.f32 %v385
      %v418 = vcvt.s32.f32 %v386
      %v419 = vcvt.s32.f32 %v387
      %v420 = vcvt.s32.f32 %v388
      %p421 = scmp.eq.s32.totalorder %s22, 0
      // Predicated region
      $region29: #{attribute_interpolation.1} parent=27 // pred_check
        %p422 = pneg %p421
      $region30: #{attribute_interpolation.1} parent=27 // pred_check_branch
        %424 = sbr.rel (%p422) target = $region32
      $region31: #{attribute_interpolation.1} parent=27 // pred_region
        %425 = vst [vmem:[#allocation2] sm:$0xff] 0.0
        %426 = vst [vmem:[#allocation2 + $0x8] sm:$0xff] 0.0
        %427 = vst [vmem:[#allocation2 + $0x10] sm:$0xff] 0.0
        %428 = vst [vmem:[#allocation2 + $0x18] sm:$0xff] 0.0
        %429 = vst [vmem:[#allocation2 + $0x20] sm:$0xff] 0.0
        %430 = vst [vmem:[#allocation2 + $0x28] sm:$0xff] 0.0
        %431 = vst [vmem:[#allocation2 + $0x30] sm:$0xf] 0.0
        %432 = vst [vmem:[#allocation2 + $0x38] sm:$0xf] 0.0
      $region32: #{attribute_interpolation.1} parent=27 // pred_fallthru
        _
      %v433 = vld [vmem:[#allocation2] sm:$0xff]
      %v434 = vld [vmem:[#allocation2 + $0x8] sm:$0xff]
      %v435 = vld [vmem:[#allocation2 + $0x10] sm:$0xff]
      %v436 = vld [vmem:[#allocation2 + $0x18] sm:$0xff]
      %v437 = vld [vmem:[#allocation2 + $0x20] sm:$0xff]
      %v438 = vld [vmem:[#allocation2 + $0x28] sm:$0xff]
      %v439 = vld [vmem:[#allocation2 + $0x30] sm:$0xf]
      %v440 = vld [vmem:[#allocation2 + $0x38] sm:$0xf]
      %441 = vmatprep.subr.mxu0 %v390
      %442 = vmatpush1.msra.mxu0 %v389
      %443 = vmatprep.subr.mxu0 %v392
      %444 = vmatpush1.msra.mxu0 %v391
      %445 = vmatprep.subr.mxu0 %v394
      %446 = vmatpush1.msra.mxu0 %v393
      %447 = vmatprep.subr.mxu0 %v396
      %448 = vmatpush1.msra.mxu0 %v395
      %449 = vmatprep.subr.mxu0 %v398
      %450 = vmatpush1.msra.mxu0 %v397
      %451 = vmatprep.subr.mxu0 %v400
      %452 = vmatpush1.msra.mxu0 %v399
      %453 = vmatprep.subr.mxu0 %v402
      %454 = vmatpush1.msra.mxu0 %v401
      %455 = vmatprep.subr.mxu0 %v404
      %456 = vmatpush1.msra.mxu0 %v403
      %457 = vmatprep.subr.mxu0 %v406
      %458 = vmatpush1.msra.mxu0 %v405
      %459 = vmatprep.subr.mxu0 %v408
      %460 = vmatpush1.msra.mxu0 %v407
      %461 = vmatprep.subr.mxu0 %v410
      %462 = vmatpush1.msra.mxu0 %v409
      %463 = vmatprep.subr.mxu0 %v412
      %464 = vmatpush1.msra.mxu0 %v411
      %465 = vmatprep.subr.mxu0 %v414
      %466 = vmatpush1.msra.mxu0 %v413
      %467 = vmatprep.subr.mxu0 %v416
      %468 = vmatpush1.msra.mxu0 %v415
      %469 = vmatprep.subr.mxu0 %v418
      %470 = vmatpush1.msra.mxu0 %v417
      %471 = vmatprep.subr.mxu0 %v420
      %472 = vmatpush1.msra.mxu0 %v419
      %473 = vmatprep.subr.mxu0 0.0
      %474 = vmatpush1.msra.mxu0 0.0
      %475 = vmatprep.subr.mxu0 0.0
      %476 = vmatpush1.msra.mxu0 0.0
      %477 = vmatprep.subr.mxu0 0.0
      %478 = vmatpush1.msra.mxu0 0.0
      %479 = vmatprep.subr.mxu0 0.0
      %480 = vmatpush1.msra.mxu0 0.0
      %481 = vmatprep.subr.mxu0 0.0
      %482 = vmatpush1.msra.mxu0 0.0
      %483 = vmatprep.subr.mxu0 0.0
      %484 = vmatpush1.msra.mxu0 0.0
      %485 = vmatprep.subr.mxu0 0.0
      %486 = vmatpush1.msra.mxu0 0.0
      %487 = vmatprep.subr.mxu0 0.0
      %488 = vmatpush1.msra.mxu0 0.0
      %489 = vmatprep.subr.mxu0 0.0
      %490 = vmatpush1.msra.mxu0 0.0
      %491 = vmatprep.subr.mxu0 0.0
      %492 = vmatpush1.msra.mxu0 0.0
      %493 = vmatprep.subr.mxu0 0.0
      %494 = vmatpush1.msra.mxu0 0.0
      %495 = vmatprep.subr.mxu0 0.0
      %496 = vmatpush1.msra.mxu0 0.0
      %497 = vmatprep.subr.mxu0 0.0
      %498 = vmatpush1.msra.mxu0 0.0
      %499 = vmatprep.subr.mxu0 0.0
      %500 = vmatpush1.msra.mxu0 0.0
      %501 = vmatprep.subr.mxu0 0.0
      %502 = vmatpush1.msra.mxu0 0.0
      %503 = vmatprep.subr.mxu0 0.0
      %504 = vmatpush1.msra.mxu0 0.0
      %505 = vmatprep.mubr.f32.mxu0 0.0
      %506 = vmatmul.mubr.f32.gmra.mrb[0].mxu0 %v274
      %v507 = vpop.f32.mrb[0].mxu0
      %v508 = vadd.f32 0.0, %v507
      %v509 = vpop.f32.mrb[0].mxu0
      %v510 = vadd.f32 0.0, %v509
      %511 = vmatprep.mubr.f32.mxu0 0.0
      %512 = vmatmul.mubr.f32.gmra.mrb[0].mxu0 %v275
      %v513 = vpop.f32.mrb[0].mxu0
      %v514 = vadd.f32 0.0, %v513
      %v515 = vpop.f32.mrb[0].mxu0
      %v516 = vadd.f32 0.0, %v515
      %517 = vmatprep.mubr.f32.mxu0 0.0
      %518 = vmatmul.mubr.f32.gmra.mrb[0].mxu0 %v276
      %v519 = vpop.f32.mrb[0].mxu0
      %v520 = vadd.f32 0.0, %v519
      %v521 = vpop.f32.mrb[0].mxu0
      %v522 = vadd.f32 0.0, %v521
      %523 = vmatprep.mubr.f32.mxu0 0.0
      %524 = vmatmul.mubr.f32.gmra.mrb[0].mxu0 %v277
      %v525 = vpop.f32.mrb[0].mxu0
      %v526 = vadd.f32 0.0, %v525
      %v527 = vpop.f32.mrb[0].mxu0
      %v528 = vadd.f32 0.0, %v527
      %529 = vdwg.mxu0
      %v530 = vadd.f32 %v433, %v508
      %v531 = vadd.f32 %v434, %v510
      %v532 = vadd.f32 %v435, %v514
      %v533 = vadd.f32 %v436, %v516
      %v534 = vadd.f32 %v437, %v520
      %v535 = vadd.f32 %v438, %v522
      %v536 = vadd.f32 %v439, %v526
      %v537 = vadd.f32 %v440, %v528
      %538 = vst [vmem:[#allocation2] sm:$0xff] %v530
      %539 = vst [vmem:[#allocation2 + $0x8] sm:$0xff] %v531
      %540 = vst [vmem:[#allocation2 + $0x10] sm:$0xff] %v532
      %541 = vst [vmem:[#allocation2 + $0x18] sm:$0xff] %v533
      %542 = vst [vmem:[#allocation2 + $0x20] sm:$0xff] %v534
      %543 = vst [vmem:[#allocation2 + $0x28] sm:$0xff] %v535
      %544 = vst [vmem:[#allocation2 + $0x30] sm:$0xf] %v536
      %545 = vst [vmem:[#allocation2 + $0x38] sm:$0xf] %v537
      // Predicated region
      $region33: #{attribute_interpolation.1} parent=27 // pred_check
        %p546 = pneg %p421
      $region34: #{attribute_interpolation.1} parent=27 // pred_check_branch
        %548 = sbr.rel (%p546) target = $region36
      $region35: #{attribute_interpolation.1} parent=27 // pred_region
        %v549 = vld [vmem:[#allocation2] sm:$0xff]
        %v550 = vld [vmem:[#allocation2 + $0x8] sm:$0xff]
        %v551 = vld [vmem:[#allocation2 + $0x10] sm:$0xff]
        %v552 = vld [vmem:[#allocation2 + $0x18] sm:$0xff]
        %v553 = vld [vmem:[#allocation2 + $0x20] sm:$0xff]
        %v554 = vld [vmem:[#allocation2 + $0x28] sm:$0xff]
        %v555 = vld [vmem:[#allocation2 + $0x30] sm:$0xf]
        %v556 = vld [vmem:[#allocation2 + $0x38] sm:$0xf]
        %v557 = vlaneseq
        %v558 = vshrl.u32 %v557, 7
        %v559 = vsub.s32 0, %v558
        %v560 = vrot.slane %v272, %v559
        %v561 = vlaneseq
        %v562 = vshrl.u32 %v561, 7
        %v563 = vsub.s32 0, %v562
        %v564 = vrot.slane %v273, %v563
        %v565 = vmul.f32 %v560, %v549
        %v566 = vmul.f32 %v564, %v550
        %v567 = vlaneseq
        %v568 = vshrl.u32 %v567, 7
        %v569 = vsub.s32 1, %v568
        %v570 = vrot.slane %v272, %v569
        %v571 = vlaneseq
        %v572 = vshrl.u32 %v571, 7
        %v573 = vsub.s32 1, %v572
        %v574 = vrot.slane %v273, %v573
        %v575 = vmul.f32 %v570, %v549
        %v576 = vmul.f32 %v574, %v550
        %v579 = vrot.slane %v575, 4
        %v580 = vrot.slane %v576, 4
        %v583 = vadd.f32 %v565, %v579
        %v584 = vadd.f32 %v566, %v580
        %v585 = vsub.f32 1.0, %v272
        %v586 = vsub.f32 1.0, %v273
        %v589 = vrot.slane %v272, 1
        %v590 = vrot.slane %v273, 1
        %v593 = vsub.f32 %v585, %v589
        %v594 = vsub.f32 %v586, %v590
        %v595 = vlaneseq
        %v596 = vshrl.u32 %v595, 7
        %v597 = vsub.s32 0, %v596
        %v598 = vrot.slane %v593, %v597
        %v599 = vlaneseq
        %v600 = vshrl.u32 %v599, 7
        %v601 = vsub.s32 0, %v600
        %v602 = vrot.slane %v594, %v601
        %v603 = vmul.f32 %v598, %v551
        %v604 = vmul.f32 %v602, %v552
        %v605 = vadd.f32 %v583, %v603
        %v606 = vadd.f32 %v584, %v604
        %v609 = vcombine.low %v605, %v606
        %611 = vst [vmem:[%s260] sm:$0xff] %v609
        %vm612 = vcmp.lt.s32.totalorder %v283, 0
        %v613 = vsub.s32 0, %v283
        %v614 = vsel %vm612, %v613, %v283
        %v615 = vshrl.u32 %v614, 1
        %v616 = vand.u32 %v614, 1
        %v617 = vsub.s32 0, %v616
        %v618 = vsel %vm612, %v617, %v616
        %vm619 = vcmp.ne.s32.totalorder %v618, 0
        %vm620 = vcmp.lt.s32.totalorder %v618, 0
        %vm621 = vmand %vm620, %vm619
        %v622 = vadd.s32 %v618, 2
        %v623 = vsel %vm621, %v622, %v618
        %vm624 = vcmp.eq.s32.totalorder %v623, 0
        %v625 = vlaneseq
        %v626 = vshrl.u32 %v625, 7
        %v627 = vsub.s32 4, %v626
        %v628 = vrot.slane %v272, %v627
        %v629 = vlaneseq
        %v630 = vshrl.u32 %v629, 7
        %v631 = vsub.s32 4, %v630
        %v632 = vrot.slane %v273, %v631
        %v633 = vlaneseq
        %v634 = vshrl.u32 %v633, 7
        %v635 = vsub.s32 5, %v634
        %v636 = vrot.slane %v272, %v635
        %v637 = vlaneseq
        %v638 = vshrl.u32 %v637, 7
        %v639 = vsub.s32 5, %v638
        %v640 = vrot.slane %v273, %v639
        %v641 = vsel %vm624, %v628, %v636
        %v642 = vsel %vm624, %v632, %v640
        %v643 = vlaneseq
        %v644 = vshrl.u32 %v643, 7
        %v645 = vsub.s32 6, %v644
        %v646 = vrot.slane %v272, %v645
        %v647 = vlaneseq
        %v648 = vshrl.u32 %v647, 7
        %v649 = vsub.s32 6, %v648
        %v650 = vrot.slane %v273, %v649
        %v651 = vlaneseq
        %v652 = vshrl.u32 %v651, 7
        %v653 = vsub.s32 7, %v652
        %v654 = vrot.slane %v272, %v653
        %v655 = vlaneseq
        %v656 = vshrl.u32 %v655, 7
        %v657 = vsub.s32 7, %v656
        %v658 = vrot.slane %v273, %v657
        %v659 = vsel %vm624, %v646, %v654
        %v660 = vsel %vm624, %v650, %v658
        %v663 = vrot.slane %v641, 4
        %v664 = vrot.slane %v642, 4
        %v667 = vmul.f32 %v551, %v663
        %v668 = vmul.f32 %v552, %v664
        %v669 = vmul.f32 %v553, %v663
        %v670 = vmul.f32 %v554, %v664
        %v673 = vrot.slane %v659, 4
        %v674 = vrot.slane %v660, 4
        %v677 = vmul.f32 %v553, %v673
        %v678 = vmul.f32 %v554, %v674
        %v679 = vmul.f32 %v555, %v673
        %v680 = vmul.f32 %v556, %v674
        %v681 = vadd.f32 %v667, %v677
        %v682 = vadd.f32 %v668, %v678
        %v683 = vadd.f32 %v669, %v679
        %v684 = vadd.f32 %v670, %v680
        %vm689 = vcmask 1043456
        %v690 = vrot.slane %v681, 4
        %v691 = vrot.slane %v683, 4
        %v692 = vsel %vm689, %v690, %v691
        %v693 = vrot.slane %v682, 4
        %v694 = vrot.slane %v684, 4
        %v695 = vsel %vm689, %v693, %v694
        %698 = vst [vmem:[%s270] sm:$0xff] %v692
        %699 = vst [vmem:[%s270 + $0x8] sm:$0xff] %v695
      $region36: #{attribute_interpolation.1} parent=27 // pred_fallthru
        _
      %s700 = smul.u32 2, %s21
      %p701 = scmp.lt.s32.totalorder %s20, 1
      %s702 = scalar_select %p701, %s20, 1
      %p703 = scmp.lt.s32.totalorder %s700, 1
      %s704 = scalar_select %p703, %s700, 1
      %s705 = smul.addr %s702, 2
      %s706 = sadd.s32 %s704, %s705
      %s707 = smul.addr %s706, 4
      %s708 = scalar_lea.vmem %s2, %s707
      %s709 = smul.u32 2, %s21
      %p710 = scmp.lt.s32.totalorder %s20, 1
      %s711 = scalar_select %p710, %s20, 1
      %p712 = scmp.lt.s32.totalorder %s709, 1
      %s713 = scalar_select %p712, %s709, 1
      %s714 = smul.addr %s711, 2
      %s715 = sadd.s32 %s713, %s714
      %s716 = smul.addr %s715, 8
      %s717 = scalar_lea.vmem %s3, %s716
      // Predicated region
      $region37: #{attribute_interpolation.1} parent=27 // pred_check
        %p718 = pneg %p110
      $region38: #{attribute_interpolation.1} parent=27 // pred_check_branch
        %720 = sbr.rel (%p718) target = $region40
      $region39: #{attribute_interpolation.1} parent=27 // pred_region
        %s721 = smul.u32 2, %s21
      $region40: #{attribute_interpolation.1} parent=27 // pred_fallthru
        _
      // Predicated region
      $region41: #{attribute_interpolation.1} parent=27 // pred_check
        %p722 = pneg %p138
      $region42: #{attribute_interpolation.1} parent=27 // pred_check_branch
        %724 = sbr.rel (%p722) target = $region44
      $region43: #{attribute_interpolation.1} parent=27 // pred_region
        %s725 = smul.u32 2, %s21
      $region44: #{attribute_interpolation.1} parent=27 // pred_fallthru
        _
    $region28: #{attribute_interpolation.1} parent=5 // pred_fallthru
      _
    %p726 = scmp.le.s32.totalorder 2, %s10
    // Predicated region
    $region45: #{attribute_interpolation.1} parent=5 // pred_check
      %p727 = pneg %p726
    $region46: #{attribute_interpolation.1} parent=5 // pred_check_branch
      %729 = sbr.rel (%p727) target = $region48
    $region47: #{attribute_interpolation.1} parent=5 // pred_region
      %s730 = ssub.s32 %s10, 2
      // Predicated region
      $region49: #{attribute_interpolation.1} parent=47 // pred_check
        %p731 = pneg %p116
      $region50: #{attribute_interpolation.1} parent=47 // pred_check_branch
        %733 = sbr.rel (%p731) target = $region52
      $region51: #{attribute_interpolation.1} parent=47 // pred_region
        %s734 = smul.u32 2, %s24
        %p735 = scmp.lt.s32.totalorder %s23, 1
        %s736 = scalar_select %p735, %s23, 1
        %p737 = scmp.lt.s32.totalorder %s734, 1
        %s738 = scalar_select %p737, %s734, 1
        %s739 = smul.addr %s736, 2
        %s740 = sadd.s32 %s738, %s739
        %s741 = smul.addr %s740, 4
        %s742 = scalar_lea.vmem %s2, %s741
      $region52: #{attribute_interpolation.1} parent=47 // pred_fallthru
        _
      // Predicated region
      $region53: #{attribute_interpolation.1} parent=47 // pred_check
        %p743 = pneg %p144
      $region54: #{attribute_interpolation.1} parent=47 // pred_check_branch
        %745 = sbr.rel (%p743) target = $region56
      $region55: #{attribute_interpolation.1} parent=47 // pred_region
        %s746 = smul.u32 2, %s24
        %p747 = scmp.lt.s32.totalorder %s23, 1
        %s748 = scalar_select %p747, %s23, 1
        %p749 = scmp.lt.s32.totalorder %s746, 1
        %s750 = scalar_select %p749, %s746, 1
        %s751 = smul.addr %s748, 2
        %s752 = sadd.s32 %s750, %s751
        %s753 = smul.addr %s752, 8
        %s754 = scalar_lea.vmem %s3, %s753
      $region56: #{attribute_interpolation.1} parent=47 // pred_fallthru
        _
    $region48: #{attribute_interpolation.1} parent=5 // pred_fallthru
      _
  $region6: #{attribute_interpolation.1} parent=0 // loop_footer
    %s14 = sadd.s32 1, %s10
  $region7: #{attribute_interpolation.1} parent=0 // loop_footer_branch
    %9 = sbr.rel target = $region3
  $region8: #{attribute_interpolation.1} parent=0 // loop_exit
    _

</llo_original>
